<compile_context>
chip_gen: v7x
topology: tpu7x:2x2x1
jax: 0.10.0
libtpu: 0.0.40
codegen_flags: <defaults>
</compile_context>

<pallas_src>
import functools

import jax
import jax.numpy as jnp
from jax.experimental import pallas as pl
from jax.experimental.pallas import tpu as pltpu


def _round_up(x, m):
    return ((x + m - 1) // m) * m


def _gelu(x, approximate):
    if approximate:
        # tanh approximation: transcendental runs on the EUP (separate VLIW slot).
        c = 0.7978845608028654  # sqrt(2/pi)
        return 0.5 * x * (1.0 + jnp.tanh(c * (x + 0.044715 * x * x * x)))
    # exact (erf-based) GELU, matching get_activation('gelu') in HF/PyTorch.
    return 0.5 * x * (1.0 + jax.lax.erf(x * 0.7071067811865476))


def mrc_head_kernel(x_ref, w1_ref, b1_ref, w2_ref, b2_ref, o_ref, *scratch,
                    th, approximate_gelu):
    # Grid: (M tiles [parallel], H blocks [arbitrary, reduction]).
    # Weights are fully VMEM-resident; per H-block:
    #   h_k = gelu(x @ W1[:, k-block] + b1[k-block])
    #   acc += h_k @ W2[k-block, :]
    # acc is the f32 output block itself when the output dtype is f32, otherwise
    # an f32 VMEM scratch that is downcast+stored at the last H-block.
    acc_ref = scratch[0] if scratch else o_ref
    hk = pl.program_id(1)

    @pl.when(hk == 0)
    def _():
        acc_ref[...] = jnp.broadcast_to(
            b2_ref[...].astype(jnp.float32), acc_ref.shape)

    off = pl.multiple_of(hk * th, 128)
    w1_blk = w1_ref[:, pl.ds(off, th)]
    b1_blk = b1_ref[:, pl.ds(off, th)]
    w2_blk = w2_ref[pl.ds(off, th), :]

    # GEMM 1: native-dtype operands to the MXU, f32 accumulation.
    h = jnp.dot(x_ref[...], w1_blk, preferred_element_type=jnp.float32)
    h = _gelu(h + b1_blk.astype(jnp.float32), approximate_gelu)

    # GEMM 2: this H-block's contribution to the (lane-padded) logits.
    acc_ref[...] += jnp.dot(h.astype(w2_blk.dtype), w2_blk,
                            preferred_element_type=jnp.float32)

    if scratch:
        @pl.when(hk == pl.num_programs(1) - 1)
        def _():
            o_ref[...] = acc_ref[...].astype(o_ref.dtype)


def discriminator_mrc_head(x, w1, b1, w2, b2, *, tm=512, th=1024,
                           approximate_gelu=False):
    """x: (batch, seq, dim) -> (batch, seq, num_labels).

    Weights are stored transposed vs. PyTorch, i.e. W[in, out], so the kernel
    computes y = x @ W + b directly on the MXU.
    """
    B, S, D = x.shape
    H = w1.shape[1]          # 4*D
    L = w2.shape[1]          # num_labels
    M = B * S

    out_dtype = x.dtype
    use_scratch = out_dtype != jnp.float32

    # Lane-dense output: pad num_labels up to a full 128-lane register.
    Lp = _round_up(L, 128)
    # Hidden-dim block (128-lane aligned), pad H to a multiple of it.
    th = min(th, _round_up(H, 128))
    Hp = _round_up(H, th)
    # Adaptive row tile (8-sublane aligned); no M padding (ragged edge block).
    tm = min(tm, _round_up(M, 8))
    # Megacore: if M is large enough for two tiles, make sure it gets >= 2 so
    # both v7x TensorCores receive work on the parallel M axis.
    if M >= 256 and pl.cdiv(M, tm) < 2:
        tm = _round_up(pl.cdiv(M, 2), 8)

    x2 = x.reshape(M, D)                                   # no pad / copy of activations
    w1p = jnp.pad(w1, ((0, 0), (0, Hp - H)))
    b1p = jnp.pad(b1.reshape(1, H), ((0, 0), (0, Hp - H)))
    w2p = jnp.pad(w2, ((0, Hp - H), (0, Lp - L)))
    b2p = jnp.pad(b2.reshape(1, L), ((0, 0), (0, Lp - L)))

    in_isz = jnp.dtype(x.dtype).itemsize
    w_isz = jnp.dtype(w1.dtype).itemsize
    out_isz = jnp.dtype(out_dtype).itemsize

    # VMEM budget: double-buffered streamed blocks, resident weights (budget 2x
    # defensively in case the compiler still double-buffers them), the f32
    # accumulator and the (tm, th) f32 GEMM1/GELU intermediates, plus headroom.
    need = (
        2 * tm * D * in_isz                      # x tile (double-buffered)
        + 2 * (D * Hp + Hp) * w_isz              # W1 + b1 (resident)
        + 2 * (Hp * Lp + Lp) * w_isz             # W2 + b2 (resident)
        + 2 * tm * Lp * out_isz                  # output tile
        + tm * Lp * 4                            # f32 accumulator
        + 2 * tm * th * 4                        # f32 pre-/post-GELU intermediates
    )
    try:
        vmem_cap = int(pltpu.get_tpu_info().vmem_capacity_bytes)
    except Exception:
        vmem_cap = 64 << 20                      # conservative (v7x per-TC)
    vmem_cap = max(vmem_cap - (16 << 20), 16 << 20)   # headroom for Mosaic scratch
    vmem_limit = int(min(need + (8 << 20), vmem_cap))

    # Resident weights are fetched exactly once per call.
    bytes_accessed = (M * D * in_isz
                      + (D * Hp + Hp + Hp * Lp + Lp) * w_isz
                      + M * Lp * out_isz)

    grid = (pl.cdiv(M, tm), Hp // th)
    scratch_shapes = [pltpu.VMEM((tm, Lp), jnp.float32)] if use_scratch else []

    kernel = functools.partial(mrc_head_kernel, th=th,
                               approximate_gelu=approximate_gelu)

    out = pl.pallas_call(
        kernel,
        out_shape=jax.ShapeDtypeStruct((M, Lp), out_dtype),
        grid_spec=pltpu.PrefetchScalarGridSpec(
            num_scalar_prefetch=0,
            grid=grid,
            in_specs=[
                pl.BlockSpec((tm, D), lambda i, k: (i, 0)),    # x tile (streamed)
                pl.BlockSpec((D, Hp), lambda i, k: (0, 0)),    # dense W (resident)
                pl.BlockSpec((1, Hp), lambda i, k: (0, 0)),    # dense b (resident)
                pl.BlockSpec((Hp, Lp), lambda i, k: (0, 0)),   # out_proj W (resident)
                pl.BlockSpec((1, Lp), lambda i, k: (0, 0)),    # out_proj b (resident)
            ],
            out_specs=pl.BlockSpec((tm, Lp), lambda i, k: (i, 0)),
            scratch_shapes=scratch_shapes,
        ),
        compiler_params=pltpu.CompilerParams(
            dimension_semantics=("parallel", "arbitrary"),
            vmem_limit_bytes=vmem_limit,
        ),
        cost_estimate=pl.CostEstimate(
            flops=2 * M * D * Hp + 2 * M * Hp * Lp,
            transcendentals=M * Hp,
            bytes_accessed=bytes_accessed,
        ),
    )(x2, w1p, b1p, w2p, b2p)

    return out[:, :L].reshape(B, S, L)


def _reference(x, w1, b1, w2, b2):
    h = jnp.einsum("bsd,dh->bsh", x, w1) + b1
    h = 0.5 * h * (1.0 + jax.lax.erf(h * 0.7071067811865476))
    return jnp.einsum("bsh,hl->bsl", h, w2) + b2


if __name__ == "__main__":
    # Small shapes consistent with the module: dim=32, num_labels=2
    B, S, D = 2, 8, 32
    H = 4 * D
    L = 2

    key = jax.random.PRNGKey(0)
    kx, kw1, kb1, kw2, kb2 = jax.random.split(key, 5)

    x = jax.random.normal(kx, (B, S, D), dtype=jnp.float32)
    # Deterministic synthetic params (Linear weights stored as (in, out))
    w1 = jax.random.normal(kw1, (D, H), dtype=jnp.float32) * (1.0 / jnp.sqrt(D))
    b1 = jax.random.normal(kb1, (H,), dtype=jnp.float32) * 0.02
    w2 = jax.random.normal(kw2, (H, L), dtype=jnp.float32) * (1.0 / jnp.sqrt(H))
    b2 = jax.random.normal(kb2, (L,), dtype=jnp.float32) * 0.02

    # f32 path (accumulates directly into the output block, no scratch).
    out = discriminator_mrc_head(x, w1, b1, w2, b2)
    out = jax.block_until_ready(out)
    ref = _reference(x, w1, b1, w2, b2)
    assert out.shape == (B, S, L)
    assert jnp.allclose(out, ref, atol=1e-4, rtol=1e-4), "f32 mismatch vs reference"

    # bf16 path (native-dtype MXU operands + f32 scratch accumulator).
    xb, w1b, b1b, w2b, b2b = (a.astype(jnp.bfloat16) for a in (x, w1, b1, w2, b2))
    out_bf16 = discriminator_mrc_head(xb, w1b, b1b, w2b, b2b)
    out_bf16 = jax.block_until_ready(out_bf16)
    ref_bf16 = _reference(*(a.astype(jnp.float32) for a in (xb, w1b, b1b, w2b, b2b)))
    assert out_bf16.shape == (B, S, L)
    assert jnp.allclose(out_bf16.astype(jnp.float32), ref_bf16,
                        atol=1e-1, rtol=1e-1), "bf16 mismatch vs reference"

    print("KERNEL_OK")
</pallas_src>

<mosaic_0001>
module attributes {stable_mosaic.version = 11 : i64} {
  func.func @mrc_head_kernel(%arg0: i32, %arg1: i32, %arg2: memref<16x32xf32, #tpu.memory_space<vmem>>, %arg3: memref<32x128xf32, #tpu.memory_space<vmem>>, %arg4: memref<1x128xf32, #tpu.memory_space<vmem>>, %arg5: memref<128x128xf32, #tpu.memory_space<vmem>>, %arg6: memref<1x128xf32, #tpu.memory_space<vmem>>, %arg7: memref<16x128xf32, #tpu.memory_space<vmem>>) attributes {dimension_semantics = [#tpu.dimension_semantics<parallel>, #tpu.dimension_semantics<arbitrary>], iteration_bounds = array<i64: 1, 1>, scalar_prefetch = 0 : i64, scratch_operands = 0 : i64, tpu.core_type = #tpu.core_type<tc>, window_params = [{transform_indices = @transform_0, window_bounds = array<i64: 16, 32>}, {pipeline_mode = #tpu.pipeline_mode<synchronous>, transform_indices = @transform_1, window_bounds = array<i64: 32, 128>}, {pipeline_mode = #tpu.pipeline_mode<synchronous>, transform_indices = @transform_2, window_bounds = array<i64: 1, 128>}, {pipeline_mode = #tpu.pipeline_mode<synchronous>, transform_indices = @transform_3, window_bounds = array<i64: 128, 128>}, {pipeline_mode = #tpu.pipeline_mode<synchronous>, transform_indices = @transform_4, window_bounds = array<i64: 1, 128>}, {transform_indices = @transform_5, window_bounds = array<i64: 16, 128>}]} {
    %c0_i32 = arith.constant 0 : i32
    %0 = arith.cmpi eq, %arg1, %c0_i32 : i32
    %1 = arith.extui %0 : i1 to i32
    %c0_i32_0 = arith.constant 0 : i32
    %2 = arith.cmpi ne, %1, %c0_i32_0 : i32
    scf.if %2 {
      %c0_13 = arith.constant 0 : index
      %c0_14 = arith.constant 0 : index
      %27 = vector.load %arg6[%c0_13, %c0_14] : memref<1x128xf32, #tpu.memory_space<vmem>>, vector<1x128xf32>
      %28 = vector.shape_cast %27 : vector<1x128xf32> to vector<1x128xf32>
      %29 = vector.broadcast %28 : vector<1x128xf32> to vector<16x128xf32>
      %c0_15 = arith.constant 0 : index
      %c0_16 = arith.constant 0 : index
      %30 = vector.load %arg7[%c0_15, %c0_16] : memref<16x128xf32, #tpu.memory_space<vmem>>, vector<16x128xf32>
      tpu.vector_store %arg7[%c0_15, %c0_16], %29 {strides = array<i32>} : memref<16x128xf32, #tpu.memory_space<vmem>>, vector<16x128xf32>,
    } else {
    }
    %c128_i32 = arith.constant 128 : i32
    %3 = arith.muli %arg1, %c128_i32 : i32
    %4 = tpu.assume_multiple %3, 128 : i32
    %c0 = arith.constant 0 : index
    %5 = arith.index_cast %4 : i32 to index
    %6 = vector.load %arg3[%c0, %5] : memref<32x128xf32, #tpu.memory_space<vmem>>, vector<32x128xf32>
    %c0_1 = arith.constant 0 : index
    %7 = arith.index_cast %4 : i32 to index
    %8 = vector.load %arg4[%c0_1, %7] : memref<1x128xf32, #tpu.memory_space<vmem>>, vector<1x128xf32>
    %9 = arith.index_cast %4 : i32 to index
    %c0_2 = arith.constant 0 : index
    %10 = vector.load %arg5[%9, %c0_2] : memref<128x128xf32, #tpu.memory_space<vmem>>, vector<128x128xf32>
    %c0_3 = arith.constant 0 : index
    %c0_4 = arith.constant 0 : index
    %11 = vector.load %arg2[%c0_3, %c0_4] : memref<16x32xf32, #tpu.memory_space<vmem>>, vector<16x32xf32>
    %cst = arith.constant dense<0.000000e+00> : vector<16x128xf32>
    %12 = tpu.matmul %11, %6, %cst {dimension_numbers = #tpu.dot_dimension_numbers<[1], [0], [0], [1], [0, 0, 1, 1], [], []>} : vector<16x32xf32>, vector<32x128xf32>, vector<16x128xf32> -> vector<16x128xf32>
    %13 = vector.broadcast %8 : vector<1x128xf32> to vector<16x128xf32>
    %14 = arith.addf %12, %13 : vector<16x128xf32>
    %cst_5 = arith.constant 5.000000e-01 : f32
    %15 = vector.broadcast %cst_5 : f32 to vector<16x128xf32>
    %16 = arith.mulf %15, %14 : vector<16x128xf32>
    %cst_6 = arith.constant 0.707106769 : f32
    %17 = vector.broadcast %cst_6 : f32 to vector<16x128xf32>
    %18 = arith.mulf %14, %17 : vector<16x128xf32>
    %19 = math.erf %18 : vector<16x128xf32>
    %cst_7 = arith.constant 1.000000e+00 : f32
    %20 = vector.broadcast %cst_7 : f32 to vector<16x128xf32>
    %21 = arith.addf %20, %19 : vector<16x128xf32>
    %22 = arith.mulf %16, %21 : vector<16x128xf32>
    %c0_8 = arith.constant 0 : index
    %c0_9 = arith.constant 0 : index
    %23 = vector.load %arg7[%c0_8, %c0_9] : memref<16x128xf32, #tpu.memory_space<vmem>>, vector<16x128xf32>
    %cst_10 = arith.constant dense<0.000000e+00> : vector<16x128xf32>
    %24 = tpu.matmul %22, %10, %cst_10 {dimension_numbers = #tpu.dot_dimension_numbers<[1], [0], [0], [1], [0, 0, 1, 1], [], []>} : vector<16x128xf32>, vector<128x128xf32>, vector<16x128xf32> -> vector<16x128xf32>
    %25 = arith.addf %23, %24 : vector<16x128xf32>
    %c0_11 = arith.constant 0 : index
    %c0_12 = arith.constant 0 : index
    %26 = vector.load %arg7[%c0_11, %c0_12] : memref<16x128xf32, #tpu.memory_space<vmem>>, vector<16x128xf32>
    tpu.vector_store %arg7[%c0_11, %c0_12], %25 {strides = array<i32>} : memref<16x128xf32, #tpu.memory_space<vmem>>, vector<16x128xf32>,
    return
  }
  func.func @transform_0(%arg0: i32, %arg1: i32) -> (i32, i32) {
    %c0_i32 = arith.constant 0 : i32
    %c0_i32_0 = arith.constant 0 : i32
    return %arg0, %c0_i32 : i32, i32
  }
  func.func @transform_1(%arg0: i32, %arg1: i32) -> (i32, i32) {
    %c0_i32 = arith.constant 0 : i32
    %c0_i32_0 = arith.constant 0 : i32
    %c0_i32_1 = arith.constant 0 : i32
    return %c0_i32, %c0_i32_0 : i32, i32
  }
  func.func @transform_2(%arg0: i32, %arg1: i32) -> (i32, i32) {
    %c0_i32 = arith.constant 0 : i32
    %c0_i32_0 = arith.constant 0 : i32
    %c0_i32_1 = arith.constant 0 : i32
    return %c0_i32, %c0_i32_0 : i32, i32
  }
  func.func @transform_3(%arg0: i32, %arg1: i32) -> (i32, i32) {
    %c0_i32 = arith.constant 0 : i32
    %c0_i32_0 = arith.constant 0 : i32
    %c0_i32_1 = arith.constant 0 : i32
    return %c0_i32, %c0_i32_0 : i32, i32
  }
  func.func @transform_4(%arg0: i32, %arg1: i32) -> (i32, i32) {
    %c0_i32 = arith.constant 0 : i32
    %c0_i32_0 = arith.constant 0 : i32
    %c0_i32_1 = arith.constant 0 : i32
    return %c0_i32, %c0_i32_0 : i32, i32
  }
  func.func @transform_5(%arg0: i32, %arg1: i32) -> (i32, i32) {
    %c0_i32 = arith.constant 0 : i32
    %c0_i32_0 = arith.constant 0 : i32
    return %arg0, %c0_i32 : i32, i32
  }
}

</mosaic_0001>

<llo_original>
// kernel: tpu_custom_call.1
$region0: #{tpu_custom_call.1}
  #allocation0 [shape = 'u32[]', space=smem, size = 0x4, offset = 0x4, fixed_abs, tag = 'smem constant byte address 0x4 - core index']
  #allocation1 [shape = 'u32[144,128]{1,0:T(1,128)}', space=vmem, size = 0x12000, scoped, tag = 'internal scratch']
  %s0 = inlined_call_operand.hbm [shape: f32[16,32], index: 0, kind: input, shape index: {}]
  %s1 = inlined_call_operand.hbm [shape: f32[32,128], index: 1, kind: input, shape index: {}]
  %s2 = inlined_call_operand.vmem [shape: f32[1,128], index: 2, kind: input, shape index: {}]
  %s3 = inlined_call_operand.hbm [shape: f32[128,128], index: 3, kind: input, shape index: {}]
  %s4 = inlined_call_operand.vmem [shape: f32[1,128], index: 4, kind: input, shape index: {}]
  %s5 = inlined_call_operand.hbm [shape: f32[16,128], index: 5, kind: output, shape index: {}]
  %s6 = sld [smem:[#allocation0]]
  $region46: #{tpu_custom_call.1} parent=0
    _
  %s8 = ssub.s32 1, %s6
  %s9 = scalar_select 0, %s8, %s6
  $region1: #{tpu_custom_call.1} parent=0
    #allocation2 [shape = 'u8[8192]{0}', space=vmem, size = 0x2000, scoped, tag = 'input window, operand 0, single buffered']
    #allocation3 [shape = 's32[1]{0}', space=sflag, size = 0x4, scoped, tag = 'scoped memory for tpu_custom_call.1']
    #allocation4 [shape = 's32[1]{0}', space=sflag, size = 0x4, scoped, tag = 'scoped memory for tpu_custom_call.1']
    #allocation5 [shape = 'u8[16384]{0}', space=vmem, size = 0x4000, scoped, tag = 'input window, operand 1, single buffered']
    #allocation6 [shape = 's32[1]{0}', space=sflag, size = 0x4, scoped, tag = 'scoped memory for tpu_custom_call.1']
    #allocation7 [shape = 'u8[65536]{0}', space=vmem, size = 0x10000, scoped, tag = 'input window, operand 3, single buffered']
    #allocation8 [shape = 'u8[8192]{0}', space=vmem, size = 0x2000, scoped, tag = 'output window, operand 0, single buffered']
    %10 = vsyncpa [#allocation3], 0
    %11 = vsyncpa [#allocation6], 0
    %12 = vsyncpa [#allocation4], 0
    // Predicated region
    $region2: #{tpu_custom_call.1} parent=1 // pred_check
      _
    $region3: #{tpu_custom_call.1} parent=1 // pred_check_branch
      %14 = sbr.rel (0) target = $region5
    $region4: #{tpu_custom_call.1} parent=1 // pred_region
      %s16 = ssub.s32 256, 256
      %17 = vsyncadd [#allocation3], %s16
      %s18 = sshll.u32 [#allocation2], 4
      %s19 = int_to_ptr.vmem [resolvable:$true] %s18
      %24 = dma.hbm_to_vmem [thread:$0]  %s0, 256, %s19, [#allocation3], 128, 128, 8
    $region5: #{tpu_custom_call.1} parent=1 // pred_fallthru
      _
    // Predicated region
    $region6: #{tpu_custom_call.1} parent=1 // pred_check
      _
    $region7: #{tpu_custom_call.1} parent=1 // pred_check_branch
      %26 = sbr.rel (0) target = $region9
    $region8: #{tpu_custom_call.1} parent=1 // pred_region
      %s28 = ssub.s32 512, 512
      %29 = vsyncadd [#allocation6], %s28
      %s30 = sshll.u32 [#allocation5], 4
      %s31 = int_to_ptr.vmem [resolvable:$true] %s30
      %36 = dma.hbm_to_vmem [thread:$0]  %s1, 512, %s31, [#allocation6], 128, 128, 8
    $region9: #{tpu_custom_call.1} parent=1 // pred_fallthru
      _
    // Predicated region
    $region10: #{tpu_custom_call.1} parent=1 // pred_check
      _
    $region11: #{tpu_custom_call.1} parent=1 // pred_check_branch
      %38 = sbr.rel (0) target = $region13
    $region12: #{tpu_custom_call.1} parent=1 // pred_region
      _
    $region13: #{tpu_custom_call.1} parent=1 // pred_fallthru
      _
    // Predicated region
    $region14: #{tpu_custom_call.1} parent=1 // pred_check
      _
    $region15: #{tpu_custom_call.1} parent=1 // pred_check_branch
      %40 = sbr.rel (0) target = $region17
    $region16: #{tpu_custom_call.1} parent=1 // pred_region
      %s42 = ssub.s32 2048, 2048
      %43 = vsyncadd [#allocation6], %s42
      %s44 = sshll.u32 [#allocation7], 4
      %s45 = int_to_ptr.vmem [resolvable:$true] %s44
      %50 = dma.hbm_to_vmem [thread:$0]  %s3, 2048, %s45, [#allocation6], 128, 128, 8
    $region17: #{tpu_custom_call.1} parent=1 // pred_fallthru
      _
    // Predicated region
    $region18: #{tpu_custom_call.1} parent=1 // pred_check
      _
    $region19: #{tpu_custom_call.1} parent=1 // pred_check_branch
      %52 = sbr.rel (0) target = $region21
    $region20: #{tpu_custom_call.1} parent=1 // pred_region
      _
    $region21: #{tpu_custom_call.1} parent=1 // pred_fallthru
      _
    // Predicated region
    $region22: #{tpu_custom_call.1} parent=1 // pred_check
      _
    $region23: #{tpu_custom_call.1} parent=1 // pred_check_branch
      %54 = sbr.rel (0) target = $region25
    $region24: #{tpu_custom_call.1} parent=1 // pred_region
      %55 = dma.done [#allocation3], 256
    $region25: #{tpu_custom_call.1} parent=1 // pred_fallthru
      _
    // Predicated region
    $region26: #{tpu_custom_call.1} parent=1 // pred_check
      _
    $region27: #{tpu_custom_call.1} parent=1 // pred_check_branch
      %57 = sbr.rel (0) target = $region29
    $region28: #{tpu_custom_call.1} parent=1 // pred_region
      %58 = dma.done [#allocation6], 512
    $region29: #{tpu_custom_call.1} parent=1 // pred_fallthru
      _
    // Predicated region
    $region30: #{tpu_custom_call.1} parent=1 // pred_check
      _
    $region31: #{tpu_custom_call.1} parent=1 // pred_check_branch
      %60 = sbr.rel (0) target = $region33
    $region32: #{tpu_custom_call.1} parent=1 // pred_region
      %61 = dma.done [#allocation6], 2048
    $region33: #{tpu_custom_call.1} parent=1 // pred_fallthru
      _
    %p62 = scmp.eq.s32.totalorder 0, 0
    // Predicated region
    $region34: #{tpu_custom_call.1} parent=1 // pred_check
      %p63 = pneg %p62
    $region35: #{tpu_custom_call.1} parent=1 // pred_check_branch
      %65 = sbr.rel (%p63) target = $region37
    $region36: #{tpu_custom_call.1} parent=1 // pred_region
      %v66 = vld [vmem:[%s4] sm:$0x1]
      %v68 = vlaneseq
      %v69 = vshrl.u32 %v68, 7
      %v70 = vsub.s32 0, %v69
      %v71 = vrot.slane %v66, %v70
      %73 = vst [vmem:[#allocation8] sm:$0xff] %v71
      %74 = vst [vmem:[#allocation8 + $0x8] sm:$0xff] %v71
    $region37: #{tpu_custom_call.1} parent=1 // pred_fallthru
      _
    %s75 = smul.u32 0, 128
    %s76 = sshra.s32 %s75, 7
    %s77 = sand.u32 %s75, 127
    %s78 = scalar_lea.vmem [#allocation5], %s76
    %v79 = vld [vmem:[%s78] sm:$0xff]
    %v80 = vld [vmem:[%s78 + $0x8] sm:$0xff]
    %v81 = vld [vmem:[%s78 + $0x10] sm:$0xff]
    %v82 = vld [vmem:[%s78 + $0x18] sm:$0xff]
    %s83 = scalar_lea.vmem %s2, %s76
    %v84 = vld [vmem:[%s83] sm:$0x1]
    %s85 = scalar_lea.vmem [#allocation7], %s75
    %v86 = vld [vmem:[%s85] sm:$0xff]
    %v87 = vld [vmem:[%s85 + $0x8] sm:$0xff]
    %v88 = vld [vmem:[%s85 + $0x10] sm:$0xff]
    %v89 = vld [vmem:[%s85 + $0x18] sm:$0xff]
    %v90 = vld [vmem:[%s85 + $0x20] sm:$0xff]
    %v91 = vld [vmem:[%s85 + $0x28] sm:$0xff]
    %v92 = vld [vmem:[%s85 + $0x30] sm:$0xff]
    %v93 = vld [vmem:[%s85 + $0x38] sm:$0xff]
    %v94 = vld [vmem:[%s85 + $0x40] sm:$0xff]
    %v95 = vld [vmem:[%s85 + $0x48] sm:$0xff]
    %v96 = vld [vmem:[%s85 + $0x50] sm:$0xff]
    %v97 = vld [vmem:[%s85 + $0x58] sm:$0xff]
    %v98 = vld [vmem:[%s85 + $0x60] sm:$0xff]
    %v99 = vld [vmem:[%s85 + $0x68] sm:$0xff]
    %v100 = vld [vmem:[%s85 + $0x70] sm:$0xff]
    %v101 = vld [vmem:[%s85 + $0x78] sm:$0xff]
    %v102 = vld [vmem:[#allocation2] sm:$0xff]
    %v103 = vld [vmem:[#allocation2 + $0x8] sm:$0xff]
    %v105 = vlaneseq
    %v106 = vshrl.u32 %v105, 7
    %v107 = vsub.s32 0, %v106
    %v108 = vrot.slane %v84, %v107
    %vm110 = vcmask 261120
    %v112 = vsel %vm110, %v102, 0
    %v115 = vsel %vm110, %v103, 0
    %117 = vmatprep.subr.mxu0 0.0
    %118 = vmatpush1.msra.mxu0 %v79
    %119 = vmatprep.subr.mxu0 0.0
    %120 = vmatpush1.msra.mxu0 %v80
    %121 = vmatprep.subr.mxu0 0.0
    %122 = vmatpush1.msra.mxu0 %v81
    %123 = vmatprep.subr.mxu0 0.0
    %124 = vmatpush1.msra.mxu0 %v82
    %125 = vmatprep.subr.mxu0 0.0
    %126 = vmatpush1.msra.mxu0 0.0
    %127 = vmatprep.subr.mxu0 0.0
    %128 = vmatpush1.msra.mxu0 0.0
    %129 = vmatprep.subr.mxu0 0.0
    %130 = vmatpush1.msra.mxu0 0.0
    %131 = vmatprep.subr.mxu0 0.0
    %132 = vmatpush1.msra.mxu0 0.0
    %133 = vmatprep.subr.mxu0 0.0
    %134 = vmatpush1.msra.mxu0 0.0
    %135 = vmatprep.subr.mxu0 0.0
    %136 = vmatpush1.msra.mxu0 0.0
    %137 = vmatprep.subr.mxu0 0.0
    %138 = vmatpush1.msra.mxu0 0.0
    %139 = vmatprep.subr.mxu0 0.0
    %140 = vmatpush1.msra.mxu0 0.0
    %141 = vmatprep.subr.mxu0 0.0
    %142 = vmatpush1.msra.mxu0 0.0
    %143 = vmatprep.subr.mxu0 0.0
    %144 = vmatpush1.msra.mxu0 0.0
    %145 = vmatprep.subr.mxu0 0.0
    %146 = vmatpush1.msra.mxu0 0.0
    %147 = vmatprep.subr.mxu0 0.0
    %148 = vmatpush1.msra.mxu0 0.0
    %149 = vmatprep.subr.mxu0 0.0
    %150 = vmatpush1.msra.mxu0 0.0
    %151 = vmatprep.subr.mxu0 0.0
    %152 = vmatpush1.msra.mxu0 0.0
    %153 = vmatprep.subr.mxu0 0.0
    %154 = vmatpush1.msra.mxu0 0.0
    %155 = vmatprep.subr.mxu0 0.0
    %156 = vmatpush1.msra.mxu0 0.0
    %157 = vmatprep.subr.mxu0 0.0
    %158 = vmatpush1.msra.mxu0 0.0
    %159 = vmatprep.subr.mxu0 0.0
    %160 = vmatpush1.msra.mxu0 0.0
    %161 = vmatprep.subr.mxu0 0.0
    %162 = vmatpush1.msra.mxu0 0.0
    %163 = vmatprep.subr.mxu0 0.0
    %164 = vmatpush1.msra.mxu0 0.0
    %165 = vmatprep.subr.mxu0 0.0
    %166 = vmatpush1.msra.mxu0 0.0
    %167 = vmatprep.subr.mxu0 0.0
    %168 = vmatpush1.msra.mxu0 0.0
    %169 = vmatprep.subr.mxu0 0.0
    %170 = vmatpush1.msra.mxu0 0.0
    %171 = vmatprep.subr.mxu0 0.0
    %172 = vmatpush1.msra.mxu0 0.0
    %173 = vmatprep.subr.mxu0 0.0
    %174 = vmatpush1.msra.mxu0 0.0
    %175 = vmatprep.subr.mxu0 0.0
    %176 = vmatpush1.msra.mxu0 0.0
    %177 = vmatprep.subr.mxu0 0.0
    %178 = vmatpush1.msra.mxu0 0.0
    %179 = vmatprep.subr.mxu0 0.0
    %180 = vmatpush1.msra.mxu0 0.0
    %181 = vmatprep.mubr.f32.mxu0 0.0
    %182 = vmatmul.mubr.f32.gmra.mrb[0].mxu0 %v112
    %v183 = vpop.f32.mrb[0].mxu0
    %v184 = vadd.f32 %v108, %v183
    %v185 = vpop.f32.mrb[0].mxu0
    %186 = vmatprep.mubr.f32.mxu0 0.0
    %187 = vmatmul.mubr.f32.gmra.mrb[0].mxu0 %v115
    %v188 = vpop.f32.mrb[0].mxu0
    %v189 = vadd.f32 %v108, %v188
    %v190 = vpop.f32.mrb[0].mxu0
    %191 = vdwg.mxu0
    %v192 = vmul.f32 %v184, 0.5
    %v193 = vmul.f32 %v189, 0.5
    %v194 = vmul.f32 %v184, 0.70710677
    %v195 = vmul.f32 %v189, 0.70710677
    %v196 = verf.f32.pop %v194
    %v197 = verf.f32.pop %v195
    %v198 = vadd.f32 %v196, 1.0
    %v199 = vadd.f32 %v197, 1.0
    %v200 = vmul.f32 %v192, %v198
    %v201 = vmul.f32 %v193, %v199
    %v202 = vld [vmem:[#allocation8] sm:$0xff]
    %v203 = vld [vmem:[#allocation8 + $0x8] sm:$0xff]
    %204 = vmatprep.subr.mxu0 0.0
    %205 = vmatpush1.msra.mxu0 %v86
    %206 = vmatprep.subr.mxu0 0.0
    %207 = vmatpush1.msra.mxu0 %v87
    %208 = vmatprep.subr.mxu0 0.0
    %209 = vmatpush1.msra.mxu0 %v88
    %210 = vmatprep.subr.mxu0 0.0
    %211 = vmatpush1.msra.mxu0 %v89
    %212 = vmatprep.subr.mxu0 0.0
    %213 = vmatpush1.msra.mxu0 %v90
    %214 = vmatprep.subr.mxu0 0.0
    %215 = vmatpush1.msra.mxu0 %v91
    %216 = vmatprep.subr.mxu0 0.0
    %217 = vmatpush1.msra.mxu0 %v92
    %218 = vmatprep.subr.mxu0 0.0
    %219 = vmatpush1.msra.mxu0 %v93
    %220 = vmatprep.subr.mxu0 0.0
    %221 = vmatpush1.msra.mxu0 %v94
    %222 = vmatprep.subr.mxu0 0.0
    %223 = vmatpush1.msra.mxu0 %v95
    %224 = vmatprep.subr.mxu0 0.0
    %225 = vmatpush1.msra.mxu0 %v96
    %226 = vmatprep.subr.mxu0 0.0
    %227 = vmatpush1.msra.mxu0 %v97
    %228 = vmatprep.subr.mxu0 0.0
    %229 = vmatpush1.msra.mxu0 %v98
    %230 = vmatprep.subr.mxu0 0.0
    %231 = vmatpush1.msra.mxu0 %v99
    %232 = vmatprep.subr.mxu0 0.0
    %233 = vmatpush1.msra.mxu0 %v100
    %234 = vmatprep.subr.mxu0 0.0
    %235 = vmatpush1.msra.mxu0 %v101
    %236 = vmatprep.subr.mxu0 0.0
    %237 = vmatpush1.msra.mxu0 0.0
    %238 = vmatprep.subr.mxu0 0.0
    %239 = vmatpush1.msra.mxu0 0.0
    %240 = vmatprep.subr.mxu0 0.0
    %241 = vmatpush1.msra.mxu0 0.0
    %242 = vmatprep.subr.mxu0 0.0
    %243 = vmatpush1.msra.mxu0 0.0
    %244 = vmatprep.subr.mxu0 0.0
    %245 = vmatpush1.msra.mxu0 0.0
    %246 = vmatprep.subr.mxu0 0.0
    %247 = vmatpush1.msra.mxu0 0.0
    %248 = vmatprep.subr.mxu0 0.0
    %249 = vmatpush1.msra.mxu0 0.0
    %250 = vmatprep.subr.mxu0 0.0
    %251 = vmatpush1.msra.mxu0 0.0
    %252 = vmatprep.subr.mxu0 0.0
    %253 = vmatpush1.msra.mxu0 0.0
    %254 = vmatprep.subr.mxu0 0.0
    %255 = vmatpush1.msra.mxu0 0.0
    %256 = vmatprep.subr.mxu0 0.0
    %257 = vmatpush1.msra.mxu0 0.0
    %258 = vmatprep.subr.mxu0 0.0
    %259 = vmatpush1.msra.mxu0 0.0
    %260 = vmatprep.subr.mxu0 0.0
    %261 = vmatpush1.msra.mxu0 0.0
    %262 = vmatprep.subr.mxu0 0.0
    %263 = vmatpush1.msra.mxu0 0.0
    %264 = vmatprep.subr.mxu0 0.0
    %265 = vmatpush1.msra.mxu0 0.0
    %266 = vmatprep.subr.mxu0 0.0
    %267 = vmatpush1.msra.mxu0 0.0
    %268 = vmatprep.mubr.f32.mxu0 0.0
    %269 = vmatmul.mubr.f32.gmra.mrb[0].mxu0 %v200
    %v270 = vpop.f32.mrb[0].mxu0
    %v271 = vadd.f32 0.0, %v270
    %v272 = vpop.f32.mrb[0].mxu0
    %273 = vmatprep.mubr.f32.mxu0 0.0
    %274 = vmatmul.mubr.f32.gmra.mrb[0].mxu0 %v201
    %v275 = vpop.f32.mrb[0].mxu0
    %v276 = vadd.f32 0.0, %v275
    %v277 = vpop.f32.mrb[0].mxu0
    %278 = vdwg.mxu0
    %v279 = vadd.f32 %v202, %v271
    %v280 = vadd.f32 %v203, %v276
    %281 = vst [vmem:[#allocation8] sm:$0xff] %v279
    %282 = vst [vmem:[#allocation8 + $0x8] sm:$0xff] %v280
    // Predicated region
    $region38: #{tpu_custom_call.1} parent=1 // pred_check
      _
    $region39: #{tpu_custom_call.1} parent=1 // pred_check_branch
      %284 = sbr.rel (0) target = $region41
    $region40: #{tpu_custom_call.1} parent=1 // pred_region
      %s286 = ssub.s32 256, 256
      %287 = vsyncadd [#allocation4], %s286
      %s288 = sshll.u32 [#allocation8], 4
      %s289 = int_to_ptr.vmem [resolvable:$true] %s288
      %294 = dma.vmem_to_hbm [thread:$0]  %s289, 256, %s5, [#allocation4], 128, 128, 8
    $region41: #{tpu_custom_call.1} parent=1 // pred_fallthru
      _
    // Predicated region
    $region42: #{tpu_custom_call.1} parent=1 // pred_check
      _
    $region43: #{tpu_custom_call.1} parent=1 // pred_check_branch
      %296 = sbr.rel (0) target = $region45
    $region44: #{tpu_custom_call.1} parent=1 // pred_region
      %297 = dma.done [#allocation4], 256
    $region45: #{tpu_custom_call.1} parent=1 // pred_fallthru
      _
    %298 = vsyncpa [#allocation3], 1
    %299 = vsyncpa [#allocation6], 1
    %300 = vsyncpa [#allocation4], 1

</llo_original>
